<compile_context>
chip_gen: v5e
topology: v5e:2x2
jax: 0.10.0
libtpu: 0.0.40
codegen_flags: <defaults>
</compile_context>

<pallas_src>
import jax
import jax.numpy as jnp
from jax.experimental import pallas as pl
from jax.experimental.pallas import tpu as pltpu


def _round_up(x: int, m: int) -> int:
    return ((x + m - 1) // m) * m


def _min_sublane(dtype) -> int:
    # Packed-sublane dtypes need taller minimum tiles: f32 -> 8, bf16 -> 16,
    # int8/fp8 -> 32.
    itemsize = jnp.dtype(dtype).itemsize
    return max(8, 8 * (4 // max(1, itemsize)))


# ----------------------------------------------------------------------------
# Kernel: out = x * mult   (mult already folded: unfitted -> 1.0)
# ----------------------------------------------------------------------------
def _scale_kernel(mult_ref, x_ref, o_ref):
    # mult_ref: (1,) f32 in SMEM; x_ref / o_ref: (tm, tn) VMEM tiles.
    o_ref[...] = x_ref[...] * mult_ref[0].astype(o_ref.dtype)


def scale_factor_forward(x, scale_factor, *, tm: int = 512, tn: int = 1024,
                         donate_x: bool = False):
    """Pallas TPU implementation of ScaleFactor.forward.

    x:            array of any shape.
    scale_factor: python float / 0-d array; 0.0 means "not fitted" => identity.
    donate_x:     alias the input buffer to the output (caller donates x).
    """
    x = jnp.asarray(x)
    orig_shape = x.shape

    # Static identity fast-path: unfitted module is a no-op, skip the kernel.
    if isinstance(scale_factor, (int, float)) and float(scale_factor) == 0.0:
        return x
    if x.size == 0:
        return x
    if not jnp.issubdtype(x.dtype, jnp.floating):
        # TODO(synk): non-float inputs (torch would type-promote) are left to
        # plain XLA; the kernel targets floating-point activations.
        s = jnp.asarray(scale_factor, jnp.float32)
        return x * jnp.where(s != 0.0, s, jnp.float32(1.0))

    # Fold the fitted check into the multiplier (scale == 0 -> multiply by 1),
    # so the kernel has no branch and the hot path is one multiply per element.
    mult = jnp.asarray(scale_factor, dtype=jnp.float32).reshape(())
    mult = jnp.where(mult != 0.0, mult, jnp.float32(1.0)).reshape((1,))

    # ---- Lane-dense 2-D slab (reshape only; no padded HBM copy). ----
    total = x.size
    lanes = None
    for n in (1024, 512, 256, 128):
        if total % n == 0 and total // n >= 8:
            lanes = n
            break
    if lanes is None:
        for n in (1024, 512, 256, 128):
            if total % n == 0:
                lanes = n
                break
    if lanes is not None:
        x2 = x.reshape(total // lanes, lanes)
    elif x.ndim >= 2:
        x2 = x.reshape(-1, x.shape[-1])   # fallback: feature dim on lanes
    else:
        x2 = x.reshape(1, total)
    M, N = x2.shape

    sub = _min_sublane(x.dtype)

    # Shrink-to-fit tiles.  Full-dim blocks are always layout-legal; otherwise
    # keep (sub, 128) alignment and let cdiv edge blocks absorb remainders.
    tm_eff = M if M <= tm else tm
    tn_eff = N if N <= tn else tn

    # Keep >= 2 steps along the (parallel) row axis on medium inputs so both
    # v7x TensorCores get work.
    if pl.cdiv(M, tm_eff) * pl.cdiv(N, tn_eff) == 1 and M > sub:
        tm_eff = _round_up(pl.cdiv(M, 2), sub)

    grid = (pl.cdiv(M, tm_eff), pl.cdiv(N, tn_eff))

    out = pl.pallas_call(
        _scale_kernel,
        out_shape=jax.ShapeDtypeStruct((M, N), x.dtype),
        grid=grid,
        in_specs=[
            pl.BlockSpec(memory_space=pltpu.MemorySpace.SMEM),    # (1,) scale
            pl.BlockSpec((tm_eff, tn_eff), lambda i, j: (i, j)),  # x tile
        ],
        out_specs=pl.BlockSpec((tm_eff, tn_eff), lambda i, j: (i, j)),
        compiler_params=pltpu.CompilerParams(
            dimension_semantics=("parallel", "parallel"),
        ),
        input_output_aliases=({1: 0} if donate_x else {}),
    )(mult, x2)

    return out.reshape(orig_shape)


# ----------------------------------------------------------------------------
# Pure-JAX reference
# ----------------------------------------------------------------------------
def scale_factor_ref(x, scale_factor):
    s = jnp.asarray(scale_factor, dtype=jnp.float32)
    mult = jnp.where(s != 0.0, s, jnp.float32(1.0)).astype(x.dtype)
    return x * mult


if __name__ == "__main__":
    key = jax.random.PRNGKey(0)
    k1, k2, k3 = jax.random.split(key, 3)

    # Case 1: fitted scale, small module-like shape (batch=2, seq=8, hidden=32)
    # -> lane-dense slab path (total = 512 elements).
    x = jax.random.normal(k1, (2, 8, 32), dtype=jnp.float32)
    scale = 1.8715
    out = jax.block_until_ready(scale_factor_forward(x, scale))
    assert out.shape == x.shape
    assert jnp.allclose(out, scale_factor_ref(x, scale), atol=1e-6, rtol=1e-6), \
        "fitted-path mismatch"

    # Case 2: not fitted (static scale == 0) -> zero-cost identity passthrough.
    out0 = jax.block_until_ready(scale_factor_forward(x, 0.0))
    assert jnp.array_equal(out0, x), "identity-path mismatch"

    # Case 3: non-128-divisible total -> fallback layout + cdiv edge blocks.
    x_odd = jax.random.normal(k2, (3, 8, 33), dtype=jnp.float32)
    out_odd = jax.block_until_ready(scale_factor_forward(x_odd, 0.5))
    assert jnp.allclose(out_odd, scale_factor_ref(x_odd, 0.5),
                        atol=1e-6, rtol=1e-6), "edge-block path mismatch"

    # Case 4: bf16 input, native-dtype multiply.
    x_bf = jax.random.normal(k3, (2, 8, 32), dtype=jnp.bfloat16)
    out_bf = jax.block_until_ready(scale_factor_forward(x_bf, scale))
    assert jnp.allclose(out_bf.astype(jnp.float32),
                        scale_factor_ref(x_bf, scale).astype(jnp.float32),
                        atol=1e-2, rtol=1e-2), "bf16-path mismatch"

    print("KERNEL_OK")
</pallas_src>

<mosaic_0001>
module attributes {stable_mosaic.version = 11 : i64} {
  func.func @_scale_kernel(%arg0: i32, %arg1: i32, %arg2: memref<1xf32, #tpu.memory_space<smem>>, %arg3: memref<1x512xf32, #tpu.memory_space<vmem>>, %arg4: memref<1x512xf32, #tpu.memory_space<vmem>>) attributes {dimension_semantics = [#tpu.dimension_semantics<parallel>, #tpu.dimension_semantics<parallel>], iteration_bounds = array<i64: 1, 1>, scalar_prefetch = 0 : i64, scratch_operands = 0 : i64, tpu.core_type = #tpu.core_type<tc>, window_params = [{transform_indices = @transform_0, window_bounds = array<i64: 1>}, {transform_indices = @transform_1, window_bounds = array<i64: 1, 512>}, {transform_indices = @transform_2, window_bounds = array<i64: 1, 512>}]} {
    %c0 = arith.constant 0 : index
    %c0_0 = arith.constant 0 : index
    %0 = vector.load %arg3[%c0, %c0_0] : memref<1x512xf32, #tpu.memory_space<vmem>>, vector<1x512xf32>
    %c0_1 = arith.constant 0 : index
    %1 = memref.load %arg2[%c0_1] : memref<1xf32, #tpu.memory_space<smem>>
    %2 = vector.broadcast %1 : f32 to vector<1x512xf32>
    %3 = arith.mulf %0, %2 : vector<1x512xf32>
    %c0_2 = arith.constant 0 : index
    %c0_3 = arith.constant 0 : index
    %4 = vector.load %arg4[%c0_2, %c0_3] : memref<1x512xf32, #tpu.memory_space<vmem>>, vector<1x512xf32>
    tpu.vector_store %arg4[%c0_2, %c0_3], %3 {strides = array<i32>} : memref<1x512xf32, #tpu.memory_space<vmem>>, vector<1x512xf32>,
    return
  }
  func.func @transform_0(%arg0: i32, %arg1: i32) -> i32 {
    %c0_i32 = arith.constant 0 : i32
    %c0_i32_0 = arith.constant 0 : i32
    return %c0_i32 : i32
  }
  func.func @transform_1(%arg0: i32, %arg1: i32) -> (i32, i32) {
    %c0_i32 = arith.constant 0 : i32
    return %arg0, %arg1 : i32, i32
  }
  func.func @transform_2(%arg0: i32, %arg1: i32) -> (i32, i32) {
    %c0_i32 = arith.constant 0 : i32
    return %arg0, %arg1 : i32, i32
  }
}

</mosaic_0001>

<llo_original>
// kernel: tpu_custom_call.1
$region0: #{tpu_custom_call.1}
  #allocation0 [shape = 'u32[]', space=smem, size = 0x4, offset = 0x4, fixed_abs, tag = 'smem constant byte address 0x4 - core index']
  #allocation1 [shape = 'u32[72,128]{1,0:T(1,128)}', space=vmem, size = 0x9000, scoped, tag = 'internal scratch']
  #allocation2 [shape = 'f32[1]{0:T(128)S(6)}', space=smem, size = 0x200, scoped, tag = 'scoped memory for tpu_custom_call.1']
  %s0 = inlined_call_operand.<no memory space> [shape: f32[1], index: 0, kind: input, shape index: {}]
  %s1 = inlined_call_operand.hbm [shape: f32[1,512], index: 1, kind: input, shape index: {}]
  %s2 = inlined_call_operand.hbm [shape: f32[1,512], index: 2, kind: output, shape index: {}]
  %s3 = sld [smem:[#allocation0]]
  $region22: #{tpu_custom_call.1} parent=0
    _
  %s5 = ssub.s32 1, %s3
  %s6 = scalar_select 0, %s5, %s3
  %7 = sst [smem:[#allocation2]] %s0
  $region1: #{tpu_custom_call.1} parent=0
    #allocation3 [shape = 'u8[2048]{0}', space=vmem, size = 0x800, scoped, tag = 'input window, operand 1, single buffered']
    #allocation4 [shape = 's32[1]{0}', space=sflag, size = 0x4, scoped, tag = 'scoped memory for tpu_custom_call.1']
    #allocation5 [shape = 's32[1]{0}', space=sflag, size = 0x4, scoped, tag = 'scoped memory for tpu_custom_call.1']
    #allocation6 [shape = 'u8[2048]{0}', space=vmem, size = 0x800, scoped, tag = 'output window, operand 0, single buffered']
    %8 = vsyncpa [#allocation4], 0
    %9 = vsyncpa [#allocation5], 0
    // Predicated region
    $region2: #{tpu_custom_call.1} parent=1 // pred_check
      _
    $region3: #{tpu_custom_call.1} parent=1 // pred_check_branch
      %11 = sbr.rel (0) target = $region5
    $region4: #{tpu_custom_call.1} parent=1 // pred_region
      _
    $region5: #{tpu_custom_call.1} parent=1 // pred_fallthru
      _
    // Predicated region
    $region6: #{tpu_custom_call.1} parent=1 // pred_check
      _
    $region7: #{tpu_custom_call.1} parent=1 // pred_check_branch
      %13 = sbr.rel (0) target = $region9
    $region8: #{tpu_custom_call.1} parent=1 // pred_region
      %15 = vsyncadd [#allocation4], 0
      %s17 = sshll.u32 %s1, 4
      %s18 = int_to_ptr.hbm [resolvable:$true] %s17
      %s19 = sshll.u32 [#allocation3], 4
      %s20 = int_to_ptr.vmem [resolvable:$true] %s19
      %22 = dma.hbm_to_vmem [thread:$0]  %s18, 64, %s20, [#allocation4]
    $region9: #{tpu_custom_call.1} parent=1 // pred_fallthru
      _
    // Predicated region
    $region10: #{tpu_custom_call.1} parent=1 // pred_check
      _
    $region11: #{tpu_custom_call.1} parent=1 // pred_check_branch
      %24 = sbr.rel (0) target = $region13
    $region12: #{tpu_custom_call.1} parent=1 // pred_region
      %26 = dma.done [#allocation4], 64
    $region13: #{tpu_custom_call.1} parent=1 // pred_fallthru
      _
    %v27 = vld [vmem:[#allocation3] sm:$0xf]
    %s28 = sld [smem:[#allocation2]]
    %v29 = vstv %s28
    %v30 = vmul.f32 %v27, %v29
    %v31 = vlaneseq
    %vm32 = vcmp.ge.s32.totalorder %v31, 0
    %vm33 = vcmp.lt.s32.totalorder %v31, 512
    %vm34 = vmand %vm32, %vm33
    %35 = vst.msk [vmem:[#allocation6] sm:$0xf] %vm34, %v30
    // Predicated region
    $region14: #{tpu_custom_call.1} parent=1 // pred_check
      _
    $region15: #{tpu_custom_call.1} parent=1 // pred_check_branch
      %37 = sbr.rel (0) target = $region17
    $region16: #{tpu_custom_call.1} parent=1 // pred_region
      %39 = vsyncadd [#allocation5], 0
      %s41 = sshll.u32 [#allocation6], 4
      %s42 = int_to_ptr.vmem [resolvable:$true] %s41
      %s43 = sshll.u32 %s2, 4
      %s44 = int_to_ptr.hbm [resolvable:$true] %s43
      %46 = dma.vmem_to_hbm [thread:$0]  %s42, 64, %s44, [#allocation5]
    $region17: #{tpu_custom_call.1} parent=1 // pred_fallthru
      _
    // Predicated region
    $region18: #{tpu_custom_call.1} parent=1 // pred_check
      _
    $region19: #{tpu_custom_call.1} parent=1 // pred_check_branch
      %48 = sbr.rel (0) target = $region21
    $region20: #{tpu_custom_call.1} parent=1 // pred_region
      %50 = dma.done [#allocation5], 64
    $region21: #{tpu_custom_call.1} parent=1 // pred_fallthru
      _
    %51 = vsyncpa [#allocation4], 1
    %52 = vsyncpa [#allocation5], 1

</llo_original>
